<compile_context>
chip_gen: v7x
topology: tpu7x:2x2x1
jax: 0.10.0
libtpu: 0.0.40
codegen_flags: <defaults>
</compile_context>

<pallas_src>
import math

import jax
import jax.numpy as jnp
from jax.experimental import pallas as pl
from jax.experimental.pallas import tpu as pltpu

# ---- small, module-consistent sizes ------------------------------------------------
B = 8            # batch (multiple of 8 -> full sublanes)
IMG_DIM = 64     # stands in for 1280
TXT_DIM = 48     # stands in for 768
D_MODEL = 128    # stands in for 256/512; a 128-lane multiple -> no output padding
NUM_HEADS = 8    # matches the module
HEAD_DIM = D_MODEL // NUM_HEADS
K_AUG = TXT_DIM + 1          # +1 for the bias ("ones") column
K_PAD = ((K_AUG + 7) // 8) * 8   # pad K to a sublane multiple (49 -> 56)


def _fused_affine_kernel(txt_ref, w_ref, out_ref):
    # Single MXU matmul in f32; bias is already folded into w via the ones
    # column of txt, so there is no bias operand and no VPU broadcast add.
    # Output is (B, D_MODEL) with D_MODEL a 128-lane multiple -> unmasked vst.
    out_ref[...] = jnp.dot(
        txt_ref[...], w_ref[...], preferred_element_type=jnp.float32
    ).astype(out_ref.dtype)


def fuse_params(params):
    """Fold txt_proj -> value in-proj -> out-proj (weights AND biases) into one
    augmented weight matrix, done once on the host.

    Valid because the length-1 softmax makes the attention output equal to the
    value projection.  Row TXT_DIM of w_aug holds the fused bias (it multiplies
    the ones column appended to txt); rows above K_AUG are zero padding.
    """
    w_fused = params["w_txt"] @ params["w_v"] @ params["w_o"]          # (TXT_DIM, D_MODEL)
    b_fused = (params["b_txt"] @ params["w_v"] @ params["w_o"]
               + params["b_v"] @ params["w_o"]
               + params["b_o"])                                         # (1, D_MODEL)
    w_aug = jnp.zeros((K_PAD, D_MODEL), jnp.float32)
    w_aug = w_aug.at[:TXT_DIM, :].set(w_fused)
    w_aug = w_aug.at[TXT_DIM, :].set(b_fused[0])
    return w_aug


def medical_cross_attention(img_feats, txt_feats, w_aug):
    """Fused forward. img_feats: (B, IMG_DIM), txt_feats: (B, TXT_DIM) -> (B, D_MODEL).

    img_feats only feeds the query; with a single key position the attention
    weights are identically 1, so the output is provably independent of it
    (the pure-JAX reference keeps the full q path and confirms this).
    """
    del img_feats  # dead path for seq_len == 1
    bsz = txt_feats.shape[0]
    assert bsz % 8 == 0, "batch should be a sublane multiple for full-width stores"

    # Bias-as-row: append a ones column (plus zero pad to K_PAD) to txt so the
    # kernel is one matmul with no separate bias operand.  In production this
    # append would be fused into the producer of txt_feats.
    txt_aug = jnp.concatenate(
        [txt_feats,
         jnp.ones((bsz, 1), txt_feats.dtype),
         jnp.zeros((bsz, K_PAD - K_AUG), txt_feats.dtype)],
        axis=-1,
    )

    # No grid: single invocation on whole arrays resident in VMEM -> no
    # double-buffering, no pipeline prologue/epilogue, 2 input DMAs + 1 output.
    out = pl.pallas_call(
        _fused_affine_kernel,
        out_shape=jax.ShapeDtypeStruct((bsz, D_MODEL), jnp.float32),
        in_specs=[
            pl.BlockSpec(memory_space=pltpu.MemorySpace.VMEM),
            pl.BlockSpec(memory_space=pltpu.MemorySpace.VMEM),
        ],
        out_specs=pl.BlockSpec(memory_space=pltpu.MemorySpace.VMEM),
    )(txt_aug, w_aug)
    return out


def init_params(key):
    def linear(k, d_in, d_out):
        kw, kb = jax.random.split(k)
        w = jax.random.normal(kw, (d_in, d_out), jnp.float32) * 0.02
        b = jax.random.normal(kb, (1, d_out), jnp.float32) * 0.02
        return w, b

    ks = jax.random.split(key, 6)
    w_img, b_img = linear(ks[0], IMG_DIM, D_MODEL)
    w_txt, b_txt = linear(ks[1], TXT_DIM, D_MODEL)
    w_q, b_q = linear(ks[2], D_MODEL, D_MODEL)
    w_k, b_k = linear(ks[3], D_MODEL, D_MODEL)
    w_v, b_v = linear(ks[4], D_MODEL, D_MODEL)
    w_o, b_o = linear(ks[5], D_MODEL, D_MODEL)
    return dict(w_img=w_img, b_img=b_img, w_txt=w_txt, b_txt=b_txt,
                w_q=w_q, b_q=b_q, w_k=w_k, b_k=b_k, w_v=w_v, b_v=b_v,
                w_o=w_o, b_o=b_o)


def reference_forward(img_feats, txt_feats, p):
    """Pure-JAX reference mirroring the PyTorch forward (full q/k/softmax path,
    seq_len = 1 for both query and key/value)."""
    q_in = img_feats @ p["w_img"] + p["b_img"]
    kv_in = txt_feats @ p["w_txt"] + p["b_txt"]
    q = (q_in @ p["w_q"] + p["b_q"]).reshape(-1, NUM_HEADS, HEAD_DIM)
    k = (kv_in @ p["w_k"] + p["b_k"]).reshape(-1, NUM_HEADS, HEAD_DIM)
    v = (kv_in @ p["w_v"] + p["b_v"]).reshape(-1, NUM_HEADS, HEAD_DIM)
    scores = jnp.sum(q * k, axis=-1, keepdims=True) / math.sqrt(HEAD_DIM)  # (B, H, Lk=1)
    weights = jax.nn.softmax(scores, axis=-1)                              # == 1 (length-1 axis)
    attn = (weights * v).reshape(-1, D_MODEL)
    return attn @ p["w_o"] + p["b_o"]


if __name__ == "__main__":
    key = jax.random.PRNGKey(0)
    k_img, k_txt, k_par = jax.random.split(key, 3)

    img_feats = jax.random.normal(k_img, (B, IMG_DIM), jnp.float32)
    txt_feats = jax.random.normal(k_txt, (B, TXT_DIM), jnp.float32)
    params = init_params(k_par)

    # Fold the whole linear chain (weights + biases) once on the host; the
    # kernel only ever sees the augmented text features and one weight matrix.
    w_aug = fuse_params(params)

    out = medical_cross_attention(img_feats, txt_feats, w_aug)
    out = jax.block_until_ready(out)

    ref = reference_forward(img_feats, txt_feats, params)
    assert out.shape == (B, D_MODEL)
    assert jnp.allclose(out, ref, rtol=1e-5, atol=1e-5), "Pallas kernel mismatch vs reference"

    print("KERNEL_OK")
</pallas_src>

<mosaic_0001>
module attributes {stable_mosaic.version = 11 : i64} {
  func.func @_fused_affine_kernel(%arg0: memref<8x56xf32, #tpu.memory_space<vmem>>, %arg1: memref<56x128xf32, #tpu.memory_space<vmem>>, %arg2: memref<8x128xf32, #tpu.memory_space<vmem>>) attributes {dimension_semantics = [], scalar_prefetch = 0 : i64, scratch_operands = 0 : i64, tpu.core_type = #tpu.core_type<tc>} {
    %c0 = arith.constant 0 : index
    %c0_0 = arith.constant 0 : index
    %0 = vector.load %arg0[%c0, %c0_0] : memref<8x56xf32, #tpu.memory_space<vmem>>, vector<8x56xf32>
    %c0_1 = arith.constant 0 : index
    %c0_2 = arith.constant 0 : index
    %1 = vector.load %arg1[%c0_1, %c0_2] : memref<56x128xf32, #tpu.memory_space<vmem>>, vector<56x128xf32>
    %cst = arith.constant dense<0.000000e+00> : vector<8x128xf32>
    %2 = tpu.matmul %0, %1, %cst {dimension_numbers = #tpu.dot_dimension_numbers<[1], [0], [0], [1], [0, 0, 1, 1], [], []>} : vector<8x56xf32>, vector<56x128xf32>, vector<8x128xf32> -> vector<8x128xf32>
    %c0_3 = arith.constant 0 : index
    %c0_4 = arith.constant 0 : index
    %3 = vector.load %arg2[%c0_3, %c0_4] : memref<8x128xf32, #tpu.memory_space<vmem>>, vector<8x128xf32>
    tpu.vector_store %arg2[%c0_3, %c0_4], %2 {strides = array<i32>} : memref<8x128xf32, #tpu.memory_space<vmem>>, vector<8x128xf32>,
    return
  }
}

</mosaic_0001>

<llo_original>
// kernel: tpu_custom_call.1
$region0: #{tpu_custom_call.1}
  #allocation0 [shape = 'u32[]', space=smem, size = 0x4, offset = 0x4, fixed_abs, tag = 'smem constant byte address 0x4 - core index']
  #allocation1 [shape = 'u32[144,128]{1,0:T(1,128)}', space=vmem, size = 0x12000, scoped, tag = 'internal scratch']
  %s0 = inlined_call_operand.hbm [shape: f32[8,56], index: 0, kind: input, shape index: {}]
  %s1 = inlined_call_operand.hbm [shape: f32[56,128], index: 1, kind: input, shape index: {}]
  %s2 = inlined_call_operand.hbm [shape: f32[8,128], index: 2, kind: output, shape index: {}]
  %s3 = sld [smem:[#allocation0]]
  $region26: #{tpu_custom_call.1} parent=0
    _
  %s5 = ssub.s32 1, %s3
  %s6 = scalar_select 0, %s5, %s3
  $region1: #{tpu_custom_call.1} parent=0
    #allocation2 [shape = 'u8[4096]{0}', space=vmem, size = 0x1000, scoped, tag = 'input window, operand 0, single buffered']
    #allocation3 [shape = 's32[1]{0}', space=sflag, size = 0x4, scoped, tag = 'scoped memory for tpu_custom_call.1']
    #allocation4 [shape = 's32[1]{0}', space=sflag, size = 0x4, scoped, tag = 'scoped memory for tpu_custom_call.1']
    #allocation5 [shape = 'u8[28672]{0}', space=vmem, size = 0x7000, scoped, tag = 'input window, operand 1, single buffered']
    #allocation6 [shape = 's32[1]{0}', space=sflag, size = 0x4, scoped, tag = 'scoped memory for tpu_custom_call.1']
    #allocation7 [shape = 'u8[4096]{0}', space=vmem, size = 0x1000, scoped, tag = 'output window, operand 0, single buffered']
    %7 = vsyncpa [#allocation3], 0
    %8 = vsyncpa [#allocation6], 0
    %9 = vsyncpa [#allocation4], 0
    // Predicated region
    $region2: #{tpu_custom_call.1} parent=1 // pred_check
      _
    $region3: #{tpu_custom_call.1} parent=1 // pred_check_branch
      %11 = sbr.rel (0) target = $region5
    $region4: #{tpu_custom_call.1} parent=1 // pred_region
      %s13 = ssub.s32 128, 128
      %14 = vsyncadd [#allocation3], %s13
      %s16 = sshll.u32 [#allocation2], 4
      %s17 = int_to_ptr.vmem [resolvable:$true] %s16
      %19 = dma.hbm_to_vmem [thread:$0]  %s0, 128, %s17, [#allocation3]
    $region5: #{tpu_custom_call.1} parent=1 // pred_fallthru
      _
    // Predicated region
    $region6: #{tpu_custom_call.1} parent=1 // pred_check
      _
    $region7: #{tpu_custom_call.1} parent=1 // pred_check_branch
      %21 = sbr.rel (0) target = $region9
    $region8: #{tpu_custom_call.1} parent=1 // pred_region
      %s23 = ssub.s32 896, 896
      %24 = vsyncadd [#allocation6], %s23
      %s25 = sshll.u32 [#allocation5], 4
      %s26 = int_to_ptr.vmem [resolvable:$true] %s25
      %31 = dma.hbm_to_vmem [thread:$0]  %s1, 896, %s26, [#allocation6], 128, 128, 8
    $region9: #{tpu_custom_call.1} parent=1 // pred_fallthru
      _
    // Predicated region
    $region10: #{tpu_custom_call.1} parent=1 // pred_check
      _
    $region11: #{tpu_custom_call.1} parent=1 // pred_check_branch
      %33 = sbr.rel (0) target = $region13
    $region12: #{tpu_custom_call.1} parent=1 // pred_region
      %34 = dma.done [#allocation3], 128
    $region13: #{tpu_custom_call.1} parent=1 // pred_fallthru
      _
    // Predicated region
    $region14: #{tpu_custom_call.1} parent=1 // pred_check
      _
    $region15: #{tpu_custom_call.1} parent=1 // pred_check_branch
      %36 = sbr.rel (0) target = $region17
    $region16: #{tpu_custom_call.1} parent=1 // pred_region
      %37 = dma.done [#allocation6], 896
    $region17: #{tpu_custom_call.1} parent=1 // pred_fallthru
      _
    %v38 = vld [vmem:[#allocation2] sm:$0xff]
    %v39 = vld [vmem:[#allocation5] sm:$0xff]
    %v40 = vld [vmem:[#allocation5 + $0x8] sm:$0xff]
    %v41 = vld [vmem:[#allocation5 + $0x10] sm:$0xff]
    %v42 = vld [vmem:[#allocation5 + $0x18] sm:$0xff]
    %v43 = vld [vmem:[#allocation5 + $0x20] sm:$0xff]
    %v44 = vld [vmem:[#allocation5 + $0x28] sm:$0xff]
    %v45 = vld [vmem:[#allocation5 + $0x30] sm:$0xff]
    %vm46 = vcmask 457728
    %v48 = vsel %vm46, %v38, 0
    %50 = vmatprep.subr.mxu0 0.0
    %51 = vmatpush1.msra.mxu0 %v39
    %52 = vmatprep.subr.mxu0 0.0
    %53 = vmatpush1.msra.mxu0 %v40
    %54 = vmatprep.subr.mxu0 0.0
    %55 = vmatpush1.msra.mxu0 %v41
    %56 = vmatprep.subr.mxu0 0.0
    %57 = vmatpush1.msra.mxu0 %v42
    %58 = vmatprep.subr.mxu0 0.0
    %59 = vmatpush1.msra.mxu0 %v43
    %60 = vmatprep.subr.mxu0 0.0
    %61 = vmatpush1.msra.mxu0 %v44
    %62 = vmatprep.subr.mxu0 0.0
    %63 = vmatpush1.msra.mxu0 %v45
    %64 = vmatprep.subr.mxu0 0.0
    %65 = vmatpush1.msra.mxu0 0.0
    %66 = vmatprep.subr.mxu0 0.0
    %67 = vmatpush1.msra.mxu0 0.0
    %68 = vmatprep.subr.mxu0 0.0
    %69 = vmatpush1.msra.mxu0 0.0
    %70 = vmatprep.subr.mxu0 0.0
    %71 = vmatpush1.msra.mxu0 0.0
    %72 = vmatprep.subr.mxu0 0.0
    %73 = vmatpush1.msra.mxu0 0.0
    %74 = vmatprep.subr.mxu0 0.0
    %75 = vmatpush1.msra.mxu0 0.0
    %76 = vmatprep.subr.mxu0 0.0
    %77 = vmatpush1.msra.mxu0 0.0
    %78 = vmatprep.subr.mxu0 0.0
    %79 = vmatpush1.msra.mxu0 0.0
    %80 = vmatprep.subr.mxu0 0.0
    %81 = vmatpush1.msra.mxu0 0.0
    %82 = vmatprep.subr.mxu0 0.0
    %83 = vmatpush1.msra.mxu0 0.0
    %84 = vmatprep.subr.mxu0 0.0
    %85 = vmatpush1.msra.mxu0 0.0
    %86 = vmatprep.subr.mxu0 0.0
    %87 = vmatpush1.msra.mxu0 0.0
    %88 = vmatprep.subr.mxu0 0.0
    %89 = vmatpush1.msra.mxu0 0.0
    %90 = vmatprep.subr.mxu0 0.0
    %91 = vmatpush1.msra.mxu0 0.0
    %92 = vmatprep.subr.mxu0 0.0
    %93 = vmatpush1.msra.mxu0 0.0
    %94 = vmatprep.subr.mxu0 0.0
    %95 = vmatpush1.msra.mxu0 0.0
    %96 = vmatprep.subr.mxu0 0.0
    %97 = vmatpush1.msra.mxu0 0.0
    %98 = vmatprep.subr.mxu0 0.0
    %99 = vmatpush1.msra.mxu0 0.0
    %100 = vmatprep.subr.mxu0 0.0
    %101 = vmatpush1.msra.mxu0 0.0
    %102 = vmatprep.subr.mxu0 0.0
    %103 = vmatpush1.msra.mxu0 0.0
    %104 = vmatprep.subr.mxu0 0.0
    %105 = vmatpush1.msra.mxu0 0.0
    %106 = vmatprep.subr.mxu0 0.0
    %107 = vmatpush1.msra.mxu0 0.0
    %108 = vmatprep.subr.mxu0 0.0
    %109 = vmatpush1.msra.mxu0 0.0
    %110 = vmatprep.subr.mxu0 0.0
    %111 = vmatpush1.msra.mxu0 0.0
    %112 = vmatprep.subr.mxu0 0.0
    %113 = vmatpush1.msra.mxu0 0.0
    %114 = vmatprep.mubr.f32.mxu0 0.0
    %115 = vmatmul.mubr.f32.gmra.mrb[0].mxu0 %v48
    %v116 = vpop.f32.mrb[0].mxu0
    %v117 = vadd.f32 0.0, %v116
    %v118 = vpop.f32.mrb[0].mxu0
    %119 = vdwg.mxu0
    %120 = vst [vmem:[#allocation7] sm:$0xff] %v117
    // Predicated region
    $region18: #{tpu_custom_call.1} parent=1 // pred_check
      _
    $region19: #{tpu_custom_call.1} parent=1 // pred_check_branch
      %122 = sbr.rel (0) target = $region21
    $region20: #{tpu_custom_call.1} parent=1 // pred_region
      %s124 = ssub.s32 128, 128
      %125 = vsyncadd [#allocation4], %s124
      %s127 = sshll.u32 [#allocation7], 4
      %s128 = int_to_ptr.vmem [resolvable:$true] %s127
      %130 = dma.vmem_to_hbm [thread:$0]  %s128, 128, %s2, [#allocation4]
    $region21: #{tpu_custom_call.1} parent=1 // pred_fallthru
      _
    // Predicated region
    $region22: #{tpu_custom_call.1} parent=1 // pred_check
      _
    $region23: #{tpu_custom_call.1} parent=1 // pred_check_branch
      %132 = sbr.rel (0) target = $region25
    $region24: #{tpu_custom_call.1} parent=1 // pred_region
      %133 = dma.done [#allocation4], 128
    $region25: #{tpu_custom_call.1} parent=1 // pred_fallthru
      _
    %134 = vsyncpa [#allocation3], 1
    %135 = vsyncpa [#allocation6], 1
    %136 = vsyncpa [#allocation4], 1

</llo_original>
